<compile_context>
chip_gen: v7x
topology: tpu7x:2x2x1
jax: 0.10.0
libtpu: 0.0.40
codegen_flags: <defaults>
</compile_context>

<pallas_src>
import jax
import jax.numpy as jnp
from jax.experimental import pallas as pl
from jax.experimental.pallas import tpu as pltpu

BN_EPS = 1e-5    # PyTorch BatchNorm default eps
GEM_EPS = 1e-6   # GeM eps


def _round_up(x, m):
    return ((x + m - 1) // m) * m


def _full_spec(shape):
    """Whole-array block for a grid=(1,) call."""
    n = len(shape)
    return pl.BlockSpec(shape, lambda i, n=n: (0,) * n)


# ---------------------------------------------------------------------------
# Kernel 1 (fused): encoder stand-in conv stem (3x3/s2 as matmul) + SiLU + GeM pooling.
#
# TODO(synk): the timm tf_efficientnet_b0_ns backbone (stem + 16 MBConv blocks) is not
# reimplemented; this single conv-stem+SiLU kernel stands in for it and produces the
# (B, F) GeM-pooled features that the classifier consumes.
#
# grid = (B, n_spatial_tiles); the spatial axis is a reduction ("arbitrary") into a per-batch
# (1, F) f32 VMEM accumulator, so the feature map never touches HBM.
# ---------------------------------------------------------------------------
def _make_conv_gem_kernel(S, tile):
    need_mask = (S % tile) != 0   # only mask rows when the spatial extent was padded

    def kernel(p_ref, x_ref, w_ref, b_ref, o_ref, acc_ref):
        j = pl.program_id(1)

        @pl.when(j == 0)
        def _():
            acc_ref[...] = jnp.zeros_like(acc_ref)

        # conv stem as matmul: (tile, Kp)bf16 @ (Kp, F)bf16 -> f32, + bias
        a = jnp.dot(x_ref[0], w_ref[...], preferred_element_type=jnp.float32) + b_ref[...]
        y = a * (1.0 / (1.0 + jnp.exp(-a)))                  # SiLU

        # GeM partial reduction: sum over spatial rows of clamp(y, eps)^p
        p = p_ref[0, 0]                                      # learned GeM exponent (SMEM scalar)
        xc = jnp.maximum(y, GEM_EPS)                         # clamp BEFORE the log (required)
        xp = jnp.exp(p * jnp.log(xc))                        # x**p — single log + single exp
        if need_mask:
            row = jax.lax.broadcasted_iota(jnp.int32, (tile, 1), 0) + j * tile
            xp = jnp.where(row < S, xp, 0.0)                 # drop zero-padded spatial rows
        acc_ref[...] += jnp.sum(xp, axis=0, keepdims=True)

        @pl.when(j == pl.num_programs(1) - 1)
        def _():
            m = acc_ref[...] * (1.0 / S)                     # spatial mean (true count S)
            o_ref[0] = jnp.exp(jnp.log(m) / p)               # m ** (1/p)

    return kernel


def conv_gem_apply(patches, w, b, gem_p, *, S, tile):
    """patches: (B, S_pad, Kp) bf16; w: (Kp, F) bf16; b: (1, F) f32; gem_p: (1,1) f32."""
    B, S_pad, Kp = patches.shape
    F = w.shape[1]
    n_tiles = S_pad // tile
    # explicit VMEM budget (double-buffered patch tile + weights + small accumulators),
    # well under v5e 16 MiB / v6e 32 MiB / v7x 64 MiB.
    vmem_bytes = min(16 * 1024 * 1024,
                     4 * (tile * Kp * 2 + Kp * F * 2) + 8 * F * 4 + (1 << 20))
    out = pl.pallas_call(
        _make_conv_gem_kernel(S, tile),
        out_shape=jax.ShapeDtypeStruct((B, 1, F), jnp.float32),
        grid=(B, n_tiles),
        in_specs=[
            pl.BlockSpec(memory_space=pltpu.MemorySpace.SMEM),          # gem_p scalar
            pl.BlockSpec((1, tile, Kp), lambda bi, j: (bi, j, 0)),      # patches tile
            pl.BlockSpec((Kp, F), lambda bi, j: (0, 0)),                # conv weights
            pl.BlockSpec((1, F), lambda bi, j: (0, 0)),                 # conv bias
        ],
        out_specs=pl.BlockSpec((1, 1, F), lambda bi, j: (bi, 0, 0)),    # pooled (resident over j)
        scratch_shapes=[pltpu.VMEM((1, F), jnp.float32)],               # GeM accumulator
        compiler_params=pltpu.CompilerParams(
            dimension_semantics=("parallel", "arbitrary"),
            vmem_limit_bytes=vmem_bytes),
    )(gem_p, patches, w, b)
    return out.reshape(B, F)                                            # Flatten


# ---------------------------------------------------------------------------
# Kernel 2: classifier.  BN1d(F) and BN1d(F/2) are folded into w1/c1 at parameter-prep time,
# F/2 and num_classes are padded to 128 lanes, so this is just matmul -> PReLU -> matmul.
# (Tiny (B, 128) problem; grid=(1,) whole-array blocks are lane-dense.)
# ---------------------------------------------------------------------------
def _classifier_kernel(h_ref, w1_ref, c1_ref, a_ref, w2_ref, c2_ref, o_ref):
    h = h_ref[...].astype(jnp.bfloat16)
    z = jnp.dot(h, w1_ref[...], preferred_element_type=jnp.float32) + c1_ref[...]   # BN1d folded in
    z = jnp.where(z >= 0, z, a_ref[...] * z)                                         # PReLU
    # Dropout(p=0.5) is the identity in eval mode.
    o_ref[...] = jnp.dot(z.astype(jnp.bfloat16), w2_ref[...],
                         preferred_element_type=jnp.float32) + c2_ref[...]


def classifier_apply(h, prep):
    B, _ = h.shape
    Cp = prep['w2'].shape[1]
    args = [h, prep['w1'], prep['c1'], prep['prelu_a'], prep['w2'], prep['c2']]
    return pl.pallas_call(
        _classifier_kernel,
        out_shape=jax.ShapeDtypeStruct((B, Cp), jnp.float32),
        grid=(1,),
        in_specs=[_full_spec(a.shape) for a in args],
        out_specs=_full_spec((B, Cp)),
    )(*args)


# ---------------------------------------------------------------------------
# Full forward (eval mode)
# ---------------------------------------------------------------------------
def classification_model_forward(x_nchw, prep, num_classes):
    B, C, T, M = x_nchw.shape
    # transpose(1,3) -> bn0 -> transpose(1,3)  ==  per-mel affine on the last axis;
    # applied here (fuses into the patch gather) instead of a standalone Pallas call.
    x = x_nchw * prep['bn0_scale'] + prep['bn0_shift']
    # spec_augmenter is training-only; eval forward skips it.
    # transpose(2,3): encoder gets NCHW (B, C, M, T); kernels use NHWC (B, H=M, W=T, C).
    x_nhwc = jnp.transpose(x, (0, 3, 2, 1))

    # im2col for the 3x3 / stride-2 / pad-1 conv stem (glue; XLA fuses affine+pad+gather).
    H, W = M, T
    Ho, Wo = (H + 2 - 3) // 2 + 1, (W + 2 - 3) // 2 + 1
    S = Ho * Wo
    xp = jnp.pad(x_nhwc, ((0, 0), (1, 1), (1, 1), (0, 0)))
    cols = [xp[:, kh::2, kw::2, :][:, :Ho, :Wo, :] for kh in range(3) for kw in range(3)]
    patches = jnp.concatenate(cols, axis=-1).reshape(B, S, 9 * C)

    # row tile (512 rows when there is enough work), padded cdiv grid, K padded to 128 lanes,
    # bf16 MXU inputs (f32 accumulation inside the kernel).
    Kp = prep['w_stem'].shape[0]
    tile = 512 if S >= 512 else max(8, _round_up(S, 8))
    S_pad = pl.cdiv(S, tile) * tile
    patches = jnp.pad(patches, ((0, 0), (0, S_pad - S), (0, Kp - 9 * C))).astype(jnp.bfloat16)

    pooled = conv_gem_apply(patches, prep['w_stem'], prep['b_stem'], prep['gem_p'],
                            S=S, tile=tile)                       # conv + SiLU + GeM + Flatten
    logits = classifier_apply(pooled, prep)                       # (B, Cp) padded logits
    return logits[:, :num_classes]


# ---------------------------------------------------------------------------
# Deterministic parameter init (mirrors module __init__ / PyTorch defaults)
# ---------------------------------------------------------------------------
def init_params(key, n_mels, in_channels, in_features, num_classes):
    F, F2 = in_features, in_features // 2
    ks = jax.random.split(key, 5)

    def uni(k, shape, bound):
        return jax.random.uniform(k, shape, jnp.float32, -bound, bound)

    return dict(
        # bn0: init_bn -> weight=1, bias=0; fresh running stats (mean 0, var 1)
        bn0_g=jnp.ones((1, n_mels), jnp.float32), bn0_b=jnp.zeros((1, n_mels), jnp.float32),
        bn0_m=jnp.zeros((1, n_mels), jnp.float32), bn0_v=jnp.ones((1, n_mels), jnp.float32),
        # encoder stand-in conv stem (3x3/s2, in_channels -> in_features), xavier-uniform
        w_stem=uni(ks[0], (9 * in_channels, F), (6.0 / (9 * in_channels + F)) ** 0.5),
        b_stem=jnp.zeros((1, F), jnp.float32),
        # GeM: p = 3.0 (nn.Parameter(torch.ones(1)*3))
        gem_p=jnp.full((1, 1), 3.0, jnp.float32),
        # classifier: BN1d(F) defaults
        bn1_g=jnp.ones((1, F), jnp.float32), bn1_b=jnp.zeros((1, F), jnp.float32),
        bn1_m=jnp.zeros((1, F), jnp.float32), bn1_v=jnp.ones((1, F), jnp.float32),
        # Linear(F, F//2) (stored transposed for the kernel)
        w1=uni(ks[1], (F, F2), 1.0 / F ** 0.5), c1=uni(ks[2], (1, F2), 1.0 / F ** 0.5),
        # BN1d(F//2) defaults, PReLU alpha = 0.25
        bn2_g=jnp.ones((1, F2), jnp.float32), bn2_b=jnp.zeros((1, F2), jnp.float32),
        bn2_m=jnp.zeros((1, F2), jnp.float32), bn2_v=jnp.ones((1, F2), jnp.float32),
        prelu_a=jnp.full((1, F2), 0.25, jnp.float32),
        # Linear(F//2, num_classes)
        w2=uni(ks[3], (F2, num_classes), 1.0 / F2 ** 0.5),
        c2=uni(ks[4], (1, num_classes), 1.0 / F2 ** 0.5),
    )


# ---------------------------------------------------------------------------
# Parameter preparation (outside the kernels, done once):
#   * bn0 -> per-mel scale/shift
#   * conv-stem weights: zero-pad K to 128, cast bf16
#   * classifier: fold BN1d(F) and BN1d(F/2) into w1/c1; pad F/2 and classes to 128 lanes; bf16 weights
# ---------------------------------------------------------------------------
def prepare_params(p, in_channels):
    F = p['w1'].shape[0]
    F2 = p['w1'].shape[1]
    C = p['w2'].shape[1]
    Kp = _round_up(9 * in_channels, 128)
    F2p = _round_up(F2, 128)
    Cp = _round_up(C, 128)

    # bn0 folded affine over the mel (last) axis of the NCHW input
    s_bn0 = p['bn0_g'] * jax.lax.rsqrt(p['bn0_v'] + BN_EPS)
    bn0_scale = s_bn0.reshape(1, 1, 1, -1)
    bn0_shift = (p['bn0_b'] - p['bn0_m'] * s_bn0).reshape(1, 1, 1, -1)

    # conv stem: pad contraction dim to a full 128-lane tile, bf16 for the MXU
    w_stem = jnp.zeros((Kp, F), jnp.float32).at[:9 * in_channels].set(p['w_stem'])
    w_stem = w_stem.astype(jnp.bfloat16)

    # fold BN1d(F):  h' = h*s0 + t0   and BN1d(F/2):  z' = z*s1 + t1   into w1 / c1
    s0 = p['bn1_g'][0] * jax.lax.rsqrt(p['bn1_v'][0] + BN_EPS)
    t0 = p['bn1_b'][0] - p['bn1_m'][0] * s0
    s1 = p['bn2_g'][0] * jax.lax.rsqrt(p['bn2_v'][0] + BN_EPS)
    t1 = p['bn2_b'][0] - p['bn2_m'][0] * s1
    w1f = (s0[:, None] * p['w1']) * s1[None, :]
    c1f = (p['c1'][0] + t0 @ p['w1']) * s1 + t1

    # pad F/2 -> F2p and classes -> Cp for lane-dense matmuls / stores
    w1p = jnp.zeros((F, F2p), jnp.float32).at[:, :F2].set(w1f).astype(jnp.bfloat16)
    c1p = jnp.zeros((1, F2p), jnp.float32).at[:, :F2].set(c1f)
    a_p = jnp.full((1, F2p), 0.25, jnp.float32).at[:, :F2].set(p['prelu_a'][0])
    w2p = jnp.zeros((F2p, Cp), jnp.float32).at[:F2, :C].set(p['w2']).astype(jnp.bfloat16)
    c2p = jnp.zeros((1, Cp), jnp.float32).at[:, :C].set(p['c2'][0])

    return dict(bn0_scale=bn0_scale, bn0_shift=bn0_shift,
                w_stem=w_stem, b_stem=p['b_stem'], gem_p=p['gem_p'],
                w1=w1p, c1=c1p, prelu_a=a_p, w2=w2p, c2=c2p)


# ---------------------------------------------------------------------------
# Pure-JAX f32 reference (same semantics, unfolded params) for a sanity check
# ---------------------------------------------------------------------------
def reference_forward(x_nchw, p):
    B, C, T, M = x_nchw.shape
    x = (x_nchw - p['bn0_m'].reshape(1, 1, 1, M)) * jax.lax.rsqrt(p['bn0_v'].reshape(1, 1, 1, M) + BN_EPS) \
        * p['bn0_g'].reshape(1, 1, 1, M) + p['bn0_b'].reshape(1, 1, 1, M)
    x_nhwc = jnp.transpose(x, (0, 3, 2, 1))
    F = p['w_stem'].shape[1]
    kern = p['w_stem'].reshape(3, 3, C, F)
    y = jax.lax.conv_general_dilated(x_nhwc, kern, (2, 2), [(1, 1), (1, 1)],
                                     dimension_numbers=('NHWC', 'HWIO', 'NHWC'))
    y = y + p['b_stem'].reshape(1, 1, 1, F)
    y = y * jax.nn.sigmoid(y)
    pp = p['gem_p'][0, 0]
    g = jnp.mean(jnp.maximum(y, GEM_EPS) ** pp, axis=(1, 2)) ** (1.0 / pp)
    h = (g - p['bn1_m'][0]) * jax.lax.rsqrt(p['bn1_v'][0] + BN_EPS) * p['bn1_g'][0] + p['bn1_b'][0]
    z = h @ p['w1'] + p['c1'][0]
    z = (z - p['bn2_m'][0]) * jax.lax.rsqrt(p['bn2_v'][0] + BN_EPS) * p['bn2_g'][0] + p['bn2_b'][0]
    z = jnp.where(z >= 0, z, p['prelu_a'][0] * z)
    return z @ p['w2'] + p['c2'][0]


if __name__ == "__main__":
    # Small synthetic shapes: batch=2, in_channels=1, 16 time frames, 32 mel bins,
    # encoder feature width 128 ("in_features"), num_classes=24 (module default).
    B, CIN, T, M = 2, 1, 16, 32
    IN_FEATURES, NUM_CLASSES = 128, 24

    key = jax.random.PRNGKey(0)
    kx, kp = jax.random.split(key)
    x = jax.random.normal(kx, (B, CIN, T, M), jnp.float32)      # PyTorch NCHW input
    raw_params = init_params(kp, M, CIN, IN_FEATURES, NUM_CLASSES)
    prep = prepare_params(raw_params, CIN)

    fwd = jax.jit(lambda xx, pp: classification_model_forward(xx, pp, NUM_CLASSES))
    out = jax.block_until_ready(fwd(x, prep))

    ref = reference_forward(x, raw_params)
    assert out.shape == (B, NUM_CLASSES), out.shape
    assert bool(jnp.all(jnp.isfinite(out)))
    assert bool(jnp.allclose(out, ref, atol=2e-2, rtol=2e-2)), \
        float(jnp.max(jnp.abs(out - ref)))
    print("KERNEL_OK")
</pallas_src>

<mosaic_0001>
module attributes {stable_mosaic.version = 11 : i64} {
  func.func @kernel(%arg0: i32, %arg1: i32, %arg2: memref<1x1xf32, #tpu.memory_space<smem>>, %arg3: memref<1x128x128xbf16, #tpu.memory_space<vmem>>, %arg4: memref<128x128xbf16, #tpu.memory_space<vmem>>, %arg5: memref<1x128xf32, #tpu.memory_space<vmem>>, %arg6: memref<1x1x128xf32, #tpu.memory_space<vmem>>, %arg7: memref<1x128xf32, #tpu.memory_space<vmem>>) attributes {dimension_semantics = [#tpu.dimension_semantics<parallel>, #tpu.dimension_semantics<arbitrary>], iteration_bounds = array<i64: 2, 1>, scalar_prefetch = 0 : i64, scratch_operands = 1 : i64, tpu.core_type = #tpu.core_type<tc>, window_params = [{transform_indices = @transform_0, window_bounds = array<i64: 1, 1>}, {transform_indices = @transform_1, window_bounds = array<i64: 1, 128, 128>}, {pipeline_mode = #tpu.pipeline_mode<synchronous>, transform_indices = @transform_2, window_bounds = array<i64: 128, 128>}, {pipeline_mode = #tpu.pipeline_mode<synchronous>, transform_indices = @transform_3, window_bounds = array<i64: 1, 128>}, {transform_indices = @transform_4, window_bounds = array<i64: 1, 1, 128>}]} {
    %c0_i32 = arith.constant 0 : i32
    %0 = arith.cmpi eq, %arg1, %c0_i32 : i32
    %1 = arith.extui %0 : i1 to i32
    %c0_i32_0 = arith.constant 0 : i32
    %2 = arith.cmpi ne, %1, %c0_i32_0 : i32
    scf.if %2 {
      %cst_20 = arith.constant 0.000000e+00 : f32
      %33 = vector.broadcast %cst_20 : f32 to vector<1x128xf32>
      %c0_21 = arith.constant 0 : index
      %c0_22 = arith.constant 0 : index
      %34 = vector.load %arg7[%c0_21, %c0_22] : memref<1x128xf32, #tpu.memory_space<vmem>>, vector<1x128xf32>
      tpu.vector_store %arg7[%c0_21, %c0_22], %33 {strides = array<i32>} : memref<1x128xf32, #tpu.memory_space<vmem>>, vector<1x128xf32>,
    } else {
    }
    %c0 = arith.constant 0 : index
    %c0_1 = arith.constant 0 : index
    %c0_2 = arith.constant 0 : index
    %3 = vector.load %arg3[%c0, %c0_1, %c0_2] : memref<1x128x128xbf16, #tpu.memory_space<vmem>>, vector<1x128x128xbf16>
    %4 = vector.shape_cast %3 : vector<1x128x128xbf16> to vector<128x128xbf16>
    %c0_3 = arith.constant 0 : index
    %c0_4 = arith.constant 0 : index
    %5 = vector.load %arg4[%c0_3, %c0_4] : memref<128x128xbf16, #tpu.memory_space<vmem>>, vector<128x128xbf16>
    %cst = arith.constant dense<0.000000e+00> : vector<128x128xf32>
    %6 = tpu.matmul %4, %5, %cst {dimension_numbers = #tpu.dot_dimension_numbers<[1], [0], [0], [1], [0, 0, 1, 1], [], []>} : vector<128x128xbf16>, vector<128x128xbf16>, vector<128x128xf32> -> vector<128x128xf32>
    %c0_5 = arith.constant 0 : index
    %c0_6 = arith.constant 0 : index
    %7 = vector.load %arg5[%c0_5, %c0_6] : memref<1x128xf32, #tpu.memory_space<vmem>>, vector<1x128xf32>
    %8 = vector.broadcast %7 : vector<1x128xf32> to vector<128x128xf32>
    %9 = arith.addf %6, %8 : vector<128x128xf32>
    %cst_7 = arith.constant 0.000000e+00 : f32
    %10 = vector.broadcast %cst_7 : f32 to vector<128x128xf32>
    %11 = arith.subf %10, %9 : vector<128x128xf32>
    %12 = math.exp %11 : vector<128x128xf32>
    %cst_8 = arith.constant 1.000000e+00 : f32
    %13 = vector.broadcast %cst_8 : f32 to vector<128x128xf32>
    %14 = arith.addf %13, %12 : vector<128x128xf32>
    %cst_9 = arith.constant 1.000000e+00 : f32
    %15 = vector.broadcast %cst_9 : f32 to vector<128x128xf32>
    %16 = arith.divf %15, %14 : vector<128x128xf32>
    %17 = arith.mulf %9, %16 : vector<128x128xf32>
    %c0_10 = arith.constant 0 : index
    %c0_11 = arith.constant 0 : index
    %18 = memref.load %arg2[%c0_10, %c0_11] : memref<1x1xf32, #tpu.memory_space<smem>>
    %cst_12 = arith.constant 9.99999997E-7 : f32
    %19 = vector.broadcast %cst_12 : f32 to vector<128x128xf32>
    %20 = arith.maximumf %17, %19 : vector<128x128xf32>
    %21 = math.log %20 : vector<128x128xf32>
    %22 = vector.broadcast %18 : f32 to vector<128x128xf32>
    %23 = arith.mulf %22, %21 : vector<128x128xf32>
    %24 = math.exp %23 : vector<128x128xf32>
    %c0_13 = arith.constant 0 : index
    %c0_14 = arith.constant 0 : index
    %25 = vector.load %arg7[%c0_13, %c0_14] : memref<1x128xf32, #tpu.memory_space<vmem>>, vector<1x128xf32>
    %cst_15 = arith.constant dense<0.000000e+00> : vector<128xf32>
    %26 = vector.multi_reduction <add>, %24, %cst_15 [0] : vector<128x128xf32> to vector<128xf32>
    %27 = vector.shape_cast %26 : vector<128xf32> to vector<1x128xf32>
    %28 = arith.addf %25, %27 : vector<1x128xf32>
    %c0_16 = arith.constant 0 : index
    %c0_17 = arith.constant 0 : index
    %29 = vector.load %arg7[%c0_16, %c0_17] : memref<1x128xf32, #tpu.memory_space<vmem>>, vector<1x128xf32>
    tpu.vector_store %arg7[%c0_16, %c0_17], %28 {strides = array<i32>} : memref<1x128xf32, #tpu.memory_space<vmem>>, vector<1x128xf32>,
    %c0_i32_18 = arith.constant 0 : i32
    %30 = arith.cmpi eq, %arg1, %c0_i32_18 : i32
    %31 = arith.extui %30 : i1 to i32
    %c0_i32_19 = arith.constant 0 : i32
    %32 = arith.cmpi ne, %31, %c0_i32_19 : i32
    scf.if %32 {
      %c0_20 = arith.constant 0 : index
      %c0_21 = arith.constant 0 : index
      %33 = vector.load %arg7[%c0_20, %c0_21] : memref<1x128xf32, #tpu.memory_space<vmem>>, vector<1x128xf32>
      %cst_22 = arith.constant 7.812500e-03 : f32
      %34 = vector.broadcast %cst_22 : f32 to vector<1x128xf32>
      %35 = arith.mulf %33, %34 : vector<1x128xf32>
      %36 = math.log %35 : vector<1x128xf32>
      %37 = vector.broadcast %18 : f32 to vector<1x128xf32>
      %38 = arith.divf %36, %37 : vector<1x128xf32>
      %39 = math.exp %38 : vector<1x128xf32>
      %c0_23 = arith.constant 0 : index
      %c0_24 = arith.constant 0 : index
      %c0_25 = arith.constant 0 : index
      %40 = vector.load %arg6[%c0_23, %c0_24, %c0_25] : memref<1x1x128xf32, #tpu.memory_space<vmem>>, vector<1x1x128xf32>
      %41 = vector.shape_cast %40 : vector<1x1x128xf32> to vector<1x128xf32>
      %42 = vector.shape_cast %39 : vector<1x128xf32> to vector<1x1x128xf32>
      tpu.vector_store %arg6[%c0_23, %c0_24, %c0_25], %42 {strides = array<i32>} : memref<1x1x128xf32, #tpu.memory_space<vmem>>, vector<1x1x128xf32>,
    } else {
    }
    return
  }
  func.func @transform_0(%arg0: i32, %arg1: i32) -> (i32, i32) {
    %c0_i32 = arith.constant 0 : i32
    %c0_i32_0 = arith.constant 0 : i32
    %c0_i32_1 = arith.constant 0 : i32
    return %c0_i32, %c0_i32_0 : i32, i32
  }
  func.func @transform_1(%arg0: i32, %arg1: i32) -> (i32, i32, i32) {
    %c0_i32 = arith.constant 0 : i32
    %c0_i32_0 = arith.constant 0 : i32
    return %arg0, %arg1, %c0_i32 : i32, i32, i32
  }
  func.func @transform_2(%arg0: i32, %arg1: i32) -> (i32, i32) {
    %c0_i32 = arith.constant 0 : i32
    %c0_i32_0 = arith.constant 0 : i32
    %c0_i32_1 = arith.constant 0 : i32
    return %c0_i32, %c0_i32_0 : i32, i32
  }
  func.func @transform_3(%arg0: i32, %arg1: i32) -> (i32, i32) {
    %c0_i32 = arith.constant 0 : i32
    %c0_i32_0 = arith.constant 0 : i32
    %c0_i32_1 = arith.constant 0 : i32
    return %c0_i32, %c0_i32_0 : i32, i32
  }
  func.func @transform_4(%arg0: i32, %arg1: i32) -> (i32, i32, i32) {
    %c0_i32 = arith.constant 0 : i32
    %c0_i32_0 = arith.constant 0 : i32
    %c0_i32_1 = arith.constant 0 : i32
    return %arg0, %c0_i32, %c0_i32_0 : i32, i32, i32
  }
}

module attributes {stable_mosaic.version = 11 : i64} {
  func.func @_classifier_kernel(%arg0: i32, %arg1: memref<2x128xf32, #tpu.memory_space<vmem>>, %arg2: memref<128x128xbf16, #tpu.memory_space<vmem>>, %arg3: memref<1x128xf32, #tpu.memory_space<vmem>>, %arg4: memref<1x128xf32, #tpu.memory_space<vmem>>, %arg5: memref<128x128xbf16, #tpu.memory_space<vmem>>, %arg6: memref<1x128xf32, #tpu.memory_space<vmem>>, %arg7: memref<2x128xf32, #tpu.memory_space<vmem>>) attributes {dimension_semantics = [#tpu.dimension_semantics<arbitrary>], iteration_bounds = array<i64: 1>, scalar_prefetch = 0 : i64, scratch_operands = 0 : i64, tpu.core_type = #tpu.core_type<tc>, window_params = [{pipeline_mode = #tpu.pipeline_mode<synchronous>, transform_indices = @transform_0, window_bounds = array<i64: 2, 128>}, {pipeline_mode = #tpu.pipeline_mode<synchronous>, transform_indices = @transform_1, window_bounds = array<i64: 128, 128>}, {pipeline_mode = #tpu.pipeline_mode<synchronous>, transform_indices = @transform_2, window_bounds = array<i64: 1, 128>}, {pipeline_mode = #tpu.pipeline_mode<synchronous>, transform_indices = @transform_3, window_bounds = array<i64: 1, 128>}, {pipeline_mode = #tpu.pipeline_mode<synchronous>, transform_indices = @transform_4, window_bounds = array<i64: 128, 128>}, {pipeline_mode = #tpu.pipeline_mode<synchronous>, transform_indices = @transform_5, window_bounds = array<i64: 1, 128>}, {pipeline_mode = #tpu.pipeline_mode<synchronous>, transform_indices = @transform_6, window_bounds = array<i64: 2, 128>}]} {
    %c0 = arith.constant 0 : index
    %c0_0 = arith.constant 0 : index
    %0 = vector.load %arg1[%c0, %c0_0] : memref<2x128xf32, #tpu.memory_space<vmem>>, vector<2x128xf32>
    %1 = arith.truncf %0 : vector<2x128xf32> to vector<2x128xbf16>
    %c0_1 = arith.constant 0 : index
    %c0_2 = arith.constant 0 : index
    %2 = vector.load %arg2[%c0_1, %c0_2] : memref<128x128xbf16, #tpu.memory_space<vmem>>, vector<128x128xbf16>
    %cst = arith.constant dense<0.000000e+00> : vector<2x128xf32>
    %3 = tpu.matmul %1, %2, %cst {dimension_numbers = #tpu.dot_dimension_numbers<[1], [0], [0], [1], [0, 0, 1, 1], [], []>} : vector<2x128xbf16>, vector<128x128xbf16>, vector<2x128xf32> -> vector<2x128xf32>
    %c0_3 = arith.constant 0 : index
    %c0_4 = arith.constant 0 : index
    %4 = vector.load %arg3[%c0_3, %c0_4] : memref<1x128xf32, #tpu.memory_space<vmem>>, vector<1x128xf32>
    %5 = vector.broadcast %4 : vector<1x128xf32> to vector<2x128xf32>
    %6 = arith.addf %3, %5 : vector<2x128xf32>
    %cst_5 = arith.constant 0.000000e+00 : f32
    %7 = vector.broadcast %cst_5 : f32 to vector<2x128xf32>
    %8 = arith.cmpf oge, %6, %7 : vector<2x128xf32>
    %c0_6 = arith.constant 0 : index
    %c0_7 = arith.constant 0 : index
    %9 = vector.load %arg4[%c0_6, %c0_7] : memref<1x128xf32, #tpu.memory_space<vmem>>, vector<1x128xf32>
    %10 = vector.broadcast %9 : vector<1x128xf32> to vector<2x128xf32>
    %11 = arith.mulf %10, %6 : vector<2x128xf32>
    %12 = arith.select %8, %6, %11 : vector<2x128xi1>, vector<2x128xf32>
    %13 = arith.truncf %12 : vector<2x128xf32> to vector<2x128xbf16>
    %c0_8 = arith.constant 0 : index
    %c0_9 = arith.constant 0 : index
    %14 = vector.load %arg5[%c0_8, %c0_9] : memref<128x128xbf16, #tpu.memory_space<vmem>>, vector<128x128xbf16>
    %cst_10 = arith.constant dense<0.000000e+00> : vector<2x128xf32>
    %15 = tpu.matmul %13, %14, %cst_10 {dimension_numbers = #tpu.dot_dimension_numbers<[1], [0], [0], [1], [0, 0, 1, 1], [], []>} : vector<2x128xbf16>, vector<128x128xbf16>, vector<2x128xf32> -> vector<2x128xf32>
    %c0_11 = arith.constant 0 : index
    %c0_12 = arith.constant 0 : index
    %16 = vector.load %arg6[%c0_11, %c0_12] : memref<1x128xf32, #tpu.memory_space<vmem>>, vector<1x128xf32>
    %17 = vector.broadcast %16 : vector<1x128xf32> to vector<2x128xf32>
    %18 = arith.addf %15, %17 : vector<2x128xf32>
    %c0_13 = arith.constant 0 : index
    %c0_14 = arith.constant 0 : index
    %19 = vector.load %arg7[%c0_13, %c0_14] : memref<2x128xf32, #tpu.memory_space<vmem>>, vector<2x128xf32>
    tpu.vector_store %arg7[%c0_13, %c0_14], %18 {strides = array<i32>} : memref<2x128xf32, #tpu.memory_space<vmem>>, vector<2x128xf32>,
    return
  }
  func.func @transform_0(%arg0: i32) -> (i32, i32) {
    %c0_i32 = arith.constant 0 : i32
    %c0_i32_0 = arith.constant 0 : i32
    %c0_i32_1 = arith.constant 0 : i32
    return %c0_i32, %c0_i32_0 : i32, i32
  }
  func.func @transform_1(%arg0: i32) -> (i32, i32) {
    %c0_i32 = arith.constant 0 : i32
    %c0_i32_0 = arith.constant 0 : i32
    %c0_i32_1 = arith.constant 0 : i32
    return %c0_i32, %c0_i32_0 : i32, i32
  }
  func.func @transform_2(%arg0: i32) -> (i32, i32) {
    %c0_i32 = arith.constant 0 : i32
    %c0_i32_0 = arith.constant 0 : i32
    %c0_i32_1 = arith.constant 0 : i32
    return %c0_i32, %c0_i32_0 : i32, i32
  }
  func.func @transform_3(%arg0: i32) -> (i32, i32) {
    %c0_i32 = arith.constant 0 : i32
    %c0_i32_0 = arith.constant 0 : i32
    %c0_i32_1 = arith.constant 0 : i32
    return %c0_i32, %c0_i32_0 : i32, i32
  }
  func.func @transform_4(%arg0: i32) -> (i32, i32) {
    %c0_i32 = arith.constant 0 : i32
    %c0_i32_0 = arith.constant 0 : i32
    %c0_i32_1 = arith.constant 0 : i32
    return %c0_i32, %c0_i32_0 : i32, i32
  }
  func.func @transform_5(%arg0: i32) -> (i32, i32) {
    %c0_i32 = arith.constant 0 : i32
    %c0_i32_0 = arith.constant 0 : i32
    %c0_i32_1 = arith.constant 0 : i32
    return %c0_i32, %c0_i32_0 : i32, i32
  }
  func.func @transform_6(%arg0: i32) -> (i32, i32) {
    %c0_i32 = arith.constant 0 : i32
    %c0_i32_0 = arith.constant 0 : i32
    %c0_i32_1 = arith.constant 0 : i32
    return %c0_i32, %c0_i32_0 : i32, i32
  }
}

</mosaic_0001>

<llo_original>
// kernel: _lambda_.3
$region0: #{_lambda_.3}
  #allocation0 [shape = 'u32[]', space=smem, size = 0x4, offset = 0x4, fixed_abs, tag = 'smem constant byte address 0x4 - core index']
  #allocation1 [shape = 'u32[144,128]{1,0:T(1,128)}', space=vmem, size = 0x12000, scoped, tag = 'internal scratch']
  %s0 = inlined_call_operand.vmem [shape: f32[2,128], index: 0, kind: input, shape index: {}]
  %s1 = inlined_call_operand.vmem [shape: bf16[128,128], index: 1, kind: input, shape index: {}]
  %s2 = inlined_call_operand.vmem [shape: f32[1,128], index: 2, kind: input, shape index: {}]
  %s3 = inlined_call_operand.vmem [shape: f32[1,128], index: 3, kind: input, shape index: {}]
  %s4 = inlined_call_operand.vmem [shape: bf16[128,128], index: 4, kind: input, shape index: {}]
  %s5 = inlined_call_operand.vmem [shape: f32[1,128], index: 5, kind: input, shape index: {}]
  %s6 = inlined_call_operand.hbm [shape: f32[2,128], index: 6, kind: output, shape index: {}]
  %s7 = sld [smem:[#allocation0]]
  $region34: #{_lambda_.3} parent=0
    _
  %s9 = ssub.s32 1, %s7
  %s10 = scalar_select 0, %s9, %s7
  $region1: #{_lambda_.3} parent=0
    #allocation2 [shape = 'u8[1024]{0}', space=vmem, size = 0x400, scoped, tag = 'output window, operand 0, single buffered']
    #allocation3 [shape = 's32[1]{0}', space=sflag, size = 0x4, scoped, tag = 'scoped memory for _lambda_.3']
    %11 = vsyncpa [#allocation3], 0
    // Predicated region
    $region2: #{_lambda_.3} parent=1 // pred_check
      _
    $region3: #{_lambda_.3} parent=1 // pred_check_branch
      %13 = sbr.rel (0) target = $region5
    $region4: #{_lambda_.3} parent=1 // pred_region
      _
    $region5: #{_lambda_.3} parent=1 // pred_fallthru
      _
    // Predicated region
    $region6: #{_lambda_.3} parent=1 // pred_check
      _
    $region7: #{_lambda_.3} parent=1 // pred_check_branch
      %15 = sbr.rel (0) target = $region9
    $region8: #{_lambda_.3} parent=1 // pred_region
      _
    $region9: #{_lambda_.3} parent=1 // pred_fallthru
      _
    // Predicated region
    $region10: #{_lambda_.3} parent=1 // pred_check
      _
    $region11: #{_lambda_.3} parent=1 // pred_check_branch
      %17 = sbr.rel (0) target = $region13
    $region12: #{_lambda_.3} parent=1 // pred_region
      _
    $region13: #{_lambda_.3} parent=1 // pred_fallthru
      _
    // Predicated region
    $region14: #{_lambda_.3} parent=1 // pred_check
      _
    $region15: #{_lambda_.3} parent=1 // pred_check_branch
      %19 = sbr.rel (0) target = $region17
    $region16: #{_lambda_.3} parent=1 // pred_region
      _
    $region17: #{_lambda_.3} parent=1 // pred_fallthru
      _
    // Predicated region
    $region18: #{_lambda_.3} parent=1 // pred_check
      _
    $region19: #{_lambda_.3} parent=1 // pred_check_branch
      %21 = sbr.rel (0) target = $region21
    $region20: #{_lambda_.3} parent=1 // pred_region
      _
    $region21: #{_lambda_.3} parent=1 // pred_fallthru
      _
    // Predicated region
    $region22: #{_lambda_.3} parent=1 // pred_check
      _
    $region23: #{_lambda_.3} parent=1 // pred_check_branch
      %23 = sbr.rel (0) target = $region25
    $region24: #{_lambda_.3} parent=1 // pred_region
      _
    $region25: #{_lambda_.3} parent=1 // pred_fallthru
      _
    %v25 = vld [vmem:[%s0] sm:$0x3]
    %v26 = vpack.c.bf16 %v25, %v25
    %v27 = vld [vmem:[%s1] sm:$0xf]
    %v28 = vld [vmem:[%s1 + $0x4] sm:$0xf]
    %v29 = vld [vmem:[%s1 + $0x8] sm:$0xf]
    %v30 = vld [vmem:[%s1 + $0xc] sm:$0xf]
    %v31 = vld [vmem:[%s1 + $0x10] sm:$0xf]
    %v32 = vld [vmem:[%s1 + $0x14] sm:$0xf]
    %v33 = vld [vmem:[%s1 + $0x18] sm:$0xf]
    %v34 = vld [vmem:[%s1 + $0x1c] sm:$0xf]
    %v35 = vld [vmem:[%s1 + $0x20] sm:$0xf]
    %v36 = vld [vmem:[%s1 + $0x24] sm:$0xf]
    %v37 = vld [vmem:[%s1 + $0x28] sm:$0xf]
    %v38 = vld [vmem:[%s1 + $0x2c] sm:$0xf]
    %v39 = vld [vmem:[%s1 + $0x30] sm:$0xf]
    %v40 = vld [vmem:[%s1 + $0x34] sm:$0xf]
    %v41 = vld [vmem:[%s1 + $0x38] sm:$0xf]
    %v42 = vld [vmem:[%s1 + $0x3c] sm:$0xf]
    %v43 = vld [vmem:[%s2] sm:$0x1]
    %v45 = vlaneseq
    %v46 = vshrl.u32 %v45, 7
    %v47 = vsub.s32 0, %v46
    %v48 = vrot.slane %v43, %v47
    %v66 = vunpack.c.l.b16 %v27
    %v67 = vunpack.c.l.b16 %v28
    %v68 = vunpack.c.l.b16 %v29
    %v69 = vunpack.c.l.b16 %v30
    %v70 = vunpack.c.l.b16 %v31
    %v71 = vunpack.c.l.b16 %v32
    %v72 = vunpack.c.l.b16 %v33
    %v73 = vunpack.c.l.b16 %v34
    %v74 = vunpack.c.l.b16 %v35
    %v75 = vunpack.c.l.b16 %v36
    %v76 = vunpack.c.l.b16 %v37
    %v77 = vunpack.c.l.b16 %v38
    %v78 = vunpack.c.l.b16 %v39
    %v79 = vunpack.c.l.b16 %v40
    %v80 = vunpack.c.l.b16 %v41
    %v81 = vunpack.c.l.b16 %v42
    %v82 = vpack.c.b16 %v67, %v66
    %v83 = vpack.c.b16 %v69, %v68
    %v84 = vpack.c.b16 %v71, %v70
    %v85 = vpack.c.b16 %v73, %v72
    %v86 = vpack.c.b16 %v75, %v74
    %v87 = vpack.c.b16 %v77, %v76
    %v88 = vpack.c.b16 %v79, %v78
    %v89 = vpack.c.b16 %v81, %v80
    %98 = vmatprep.subr.bf16.mxu0 0
    %99 = vmatpush1.bf16.msra.mxu0 %v82
    %100 = vmatprep.subr.bf16.mxu0 0
    %101 = vmatpush1.bf16.msra.mxu0 %v83
    %102 = vmatprep.subr.bf16.mxu0 0
    %103 = vmatpush1.bf16.msra.mxu0 %v84
    %104 = vmatprep.subr.bf16.mxu0 0
    %105 = vmatpush1.bf16.msra.mxu0 %v85
    %106 = vmatprep.subr.bf16.mxu0 0
    %107 = vmatpush1.bf16.msra.mxu0 %v86
    %108 = vmatprep.subr.bf16.mxu0 0
    %109 = vmatpush1.bf16.msra.mxu0 %v87
    %110 = vmatprep.subr.bf16.mxu0 0
    %111 = vmatpush1.bf16.msra.mxu0 %v88
    %112 = vmatprep.subr.bf16.mxu0 0
    %113 = vmatpush1.bf16.msra.mxu0 %v89
    %114 = vmatprep.subr.bf16.mxu0 0
    %115 = vmatpush1.bf16.msra.mxu0 0
    %116 = vmatprep.subr.bf16.mxu0 0
    %117 = vmatpush1.bf16.msra.mxu0 0
    %118 = vmatprep.subr.bf16.mxu0 0
    %119 = vmatpush1.bf16.msra.mxu0 0
    %120 = vmatprep.subr.bf16.mxu0 0
    %121 = vmatpush1.bf16.msra.mxu0 0
    %122 = vmatprep.subr.bf16.mxu0 0
    %123 = vmatpush1.bf16.msra.mxu0 0
    %124 = vmatprep.subr.bf16.mxu0 0
    %125 = vmatpush1.bf16.msra.mxu0 0
    %126 = vmatprep.subr.bf16.mxu0 0
    %127 = vmatpush1.bf16.msra.mxu0 0
    %128 = vmatprep.subr.bf16.mxu0 0
    %129 = vmatpush1.bf16.msra.mxu0 0
    %130 = vmatprep.mubr.bf16.mxu0 0
    %131 = vmatmul.mubr.bf16.gmra.mrb[0].mxu0 %v26
    %v132 = vpop.f32.mrb[0].mxu0
    %v133 = vadd.f32 %v48, %v132
    %v134 = vpop.f32.mrb[0].mxu0
    %v135 = vpop.f32.mrb[0].mxu0
    %v136 = vpop.f32.mrb[0].mxu0
    %137 = vdwg.mxu0
    %vm138 = vcmp.ge.f32.partialorder %v133, 0.0
    %v139 = vld [vmem:[%s3] sm:$0x1]
    %v141 = vlaneseq
    %v142 = vshrl.u32 %v141, 7
    %v143 = vsub.s32 0, %v142
    %v144 = vrot.slane %v139, %v143
    %v146 = vmul.f32 %v144, %v133
    %v147 = vsel %vm138, %v133, %v146
    %v148 = vpack.c.bf16 %v147, %v147
    %v149 = vld [vmem:[%s4] sm:$0xf]
    %v150 = vld [vmem:[%s4 + $0x4] sm:$0xf]
    %v151 = vld [vmem:[%s4 + $0x8] sm:$0xf]
    %v152 = vld [vmem:[%s4 + $0xc] sm:$0xf]
    %v153 = vld [vmem:[%s4 + $0x10] sm:$0xf]
    %v154 = vld [vmem:[%s4 + $0x14] sm:$0xf]
    %v155 = vld [vmem:[%s4 + $0x18] sm:$0xf]
    %v156 = vld [vmem:[%s4 + $0x1c] sm:$0xf]
    %v157 = vld [vmem:[%s4 + $0x20] sm:$0xf]
    %v158 = vld [vmem:[%s4 + $0x24] sm:$0xf]
    %v159 = vld [vmem:[%s4 + $0x28] sm:$0xf]
    %v160 = vld [vmem:[%s4 + $0x2c] sm:$0xf]
    %v161 = vld [vmem:[%s4 + $0x30] sm:$0xf]
    %v162 = vld [vmem:[%s4 + $0x34] sm:$0xf]
    %v163 = vld [vmem:[%s4 + $0x38] sm:$0xf]
    %v164 = vld [vmem:[%s4 + $0x3c] sm:$0xf]
    %v165 = vld [vmem:[%s5] sm:$0x1]
    %v167 = vlaneseq
    %v168 = vshrl.u32 %v167, 7
    %v169 = vsub.s32 0, %v168
    %v170 = vrot.slane %v165, %v169
    %v188 = vunpack.c.l.b16 %v149
    %v189 = vunpack.c.l.b16 %v150
    %v190 = vunpack.c.l.b16 %v151
    %v191 = vunpack.c.l.b16 %v152
    %v192 = vunpack.c.l.b16 %v153
    %v193 = vunpack.c.l.b16 %v154
    %v194 = vunpack.c.l.b16 %v155
    %v195 = vunpack.c.l.b16 %v156
    %v196 = vunpack.c.l.b16 %v157
    %v197 = vunpack.c.l.b16 %v158
    %v198 = vunpack.c.l.b16 %v159
    %v199 = vunpack.c.l.b16 %v160
    %v200 = vunpack.c.l.b16 %v161
    %v201 = vunpack.c.l.b16 %v162
    %v202 = vunpack.c.l.b16 %v163
    %v203 = vunpack.c.l.b16 %v164
    %v204 = vpack.c.b16 %v189, %v188
    %v205 = vpack.c.b16 %v191, %v190
    %v206 = vpack.c.b16 %v193, %v192
    %v207 = vpack.c.b16 %v195, %v194
    %v208 = vpack.c.b16 %v197, %v196
    %v209 = vpack.c.b16 %v199, %v198
    %v210 = vpack.c.b16 %v201, %v200
    %v211 = vpack.c.b16 %v203, %v202
    %220 = vmatprep.subr.bf16.mxu0 0
    %221 = vmatpush1.bf16.msra.mxu0 %v204
    %222 = vmatprep.subr.bf16.mxu0 0
    %223 = vmatpush1.bf16.msra.mxu0 %v205
    %224 = vmatprep.subr.bf16.mxu0 0
    %225 = vmatpush1.bf16.msra.mxu0 %v206
    %226 = vmatprep.subr.bf16.mxu0 0
    %227 = vmatpush1.bf16.msra.mxu0 %v207
    %228 = vmatprep.subr.bf16.mxu0 0
    %229 = vmatpush1.bf16.msra.mxu0 %v208
    %230 = vmatprep.subr.bf16.mxu0 0
    %231 = vmatpush1.bf16.msra.mxu0 %v209
    %232 = vmatprep.subr.bf16.mxu0 0
    %233 = vmatpush1.bf16.msra.mxu0 %v210
    %234 = vmatprep.subr.bf16.mxu0 0
    %235 = vmatpush1.bf16.msra.mxu0 %v211
    %236 = vmatprep.subr.bf16.mxu0 0
    %237 = vmatpush1.bf16.msra.mxu0 0
    %238 = vmatprep.subr.bf16.mxu0 0
    %239 = vmatpush1.bf16.msra.mxu0 0
    %240 = vmatprep.subr.bf16.mxu0 0
    %241 = vmatpush1.bf16.msra.mxu0 0
    %242 = vmatprep.subr.bf16.mxu0 0
    %243 = vmatpush1.bf16.msra.mxu0 0
    %244 = vmatprep.subr.bf16.mxu0 0
    %245 = vmatpush1.bf16.msra.mxu0 0
    %246 = vmatprep.subr.bf16.mxu0 0
    %247 = vmatpush1.bf16.msra.mxu0 0
    %248 = vmatprep.subr.bf16.mxu0 0
    %249 = vmatpush1.bf16.msra.mxu0 0
    %250 = vmatprep.subr.bf16.mxu0 0
    %251 = vmatpush1.bf16.msra.mxu0 0
    %252 = vmatprep.mubr.bf16.mxu0 0
    %253 = vmatmul.mubr.bf16.gmra.mrb[0].mxu0 %v148
    %v254 = vpop.f32.mrb[0].mxu0
    %v255 = vadd.f32 %v170, %v254
    %v256 = vpop.f32.mrb[0].mxu0
    %v257 = vpop.f32.mrb[0].mxu0
    %v258 = vpop.f32.mrb[0].mxu0
    %259 = vdwg.mxu0
    %260 = vst [vmem:[#allocation2] sm:$0x3] %v255
    // Predicated region
    $region26: #{_lambda_.3} parent=1 // pred_check
      _
    $region27: #{_lambda_.3} parent=1 // pred_check_branch
      %262 = sbr.rel (0) target = $region29
    $region28: #{_lambda_.3} parent=1 // pred_region
      %s264 = ssub.s32 32, 32
      %265 = vsyncadd [#allocation3], %s264
      %s267 = sshll.u32 [#allocation2], 4
      %s268 = int_to_ptr.vmem [resolvable:$true] %s267
      %270 = dma.vmem_to_hbm [thread:$0]  %s268, 32, %s6, [#allocation3]
    $region29: #{_lambda_.3} parent=1 // pred_fallthru
      _
    // Predicated region
    $region30: #{_lambda_.3} parent=1 // pred_check
      _
    $region31: #{_lambda_.3} parent=1 // pred_check_branch
      %272 = sbr.rel (0) target = $region33
    $region32: #{_lambda_.3} parent=1 // pred_region
      %273 = dma.done [#allocation3], 32
    $region33: #{_lambda_.3} parent=1 // pred_fallthru
      _
    %274 = vsyncpa [#allocation3], 1

// kernel: _lambda_.2
$region0: #{_lambda_.2}
  #allocation0 [shape = 'u32[]', space=smem, size = 0x4, offset = 0x4, fixed_abs, tag = 'smem constant byte address 0x4 - core index']
  #allocation1 [shape = 'u32[144,128]{1,0:T(1,128)}', space=vmem, size = 0x12000, scoped, tag = 'internal scratch']
  #allocation2 [shape = 'f32[1,128]{1,0:T(1,128)}', space=vmem, size = 0x200, scoped, tag = 'scratch operand']
  #allocation3 [shape = 'f32[1,1]{1,0:T(1,128)S(6)}', space=smem, size = 0x200, scoped, tag = 'scoped memory for _lambda_.2']
  %s0 = inlined_call_operand.<no memory space> [shape: f32[1,1], index: 0, kind: input, shape index: {}]
  %s1 = inlined_call_operand.vmem [shape: bf16[2,128,128], index: 1, kind: input, shape index: {}]
  %s2 = inlined_call_operand.vmem [shape: bf16[128,128], index: 2, kind: input, shape index: {}]
  %s3 = inlined_call_operand.vmem [shape: f32[1,128], index: 3, kind: input, shape index: {}]
  %s4 = inlined_call_operand.vmem [shape: f32[2,1,128], index: 4, kind: output, shape index: {}]
  %s5 = sld [smem:[#allocation0]]
  $region57: #{_lambda_.2} parent=0
    _
  %s7 = ssub.s32 1, %s5
  %s8 = scalar_select 0, %s7, %s5
  %9 = sst [smem:[#allocation3]] %s0
  loop: start=0, step=1, limit=4
  $region2: #{_lambda_.2} parent=0 // loop_pre_header
    _
  $region3: #{_lambda_.2} parent=0 // loop_header
    %s11 = sphi 0, %s15
    %p12 = scmp.ge.s32.totalorder %s11, 4
    %s18 = sphi 0, %s30
    %s19 = sphi 0, %s26
    %s20 = sphi 0, %s18
    %s21 = sphi 0, %s19
    %s22 = sphi 0, %s20
    %s23 = sphi 0, %s21
    %s31 = sphi 0, %s31
    %s33 = sphi 0, %s31
    %s34 = sphi 0, %s33
    %s48 = sphi 0, %s34
    %s56 = sphi 0, %s58
    %s59 = sphi 0, %s56
    %s60 = sphi 0, %s59
    %s76 = sphi 0, %s60
    %s80 = sphi 0, %s80
    %s82 = sphi 0, %s80
    %s83 = sphi 0, %s82
    %s97 = sphi 0, %s83
    %s101 = sphi 0, %s101
    %s103 = sphi 0, %s101
    %s104 = sphi 0, %s103
    %s118 = sphi 0, %s104
    %s124 = sphi 0, %s126
    %s127 = sphi 0, %s124
    %s128 = sphi 0, %s127
    %s144 = sphi 0, %s128
  $region4: #{_lambda_.2} parent=0 // loop_header_branch
    %14 = sbr.rel (%p12) target = $region8
  $region5: #{_lambda_.2} parent=0 // loop_body
    %s16 = ssub.s32 %s11, 1
    %s17 = ssub.s32 %s11, 2
    %s24 = sadd.s32 1, %s19
    %p25 = scmp.ge.s32.totalorder %s24, 1
    %s26 = scalar_select %p25, 0, %s24
    %s27 = sadd.s32 1, %s18
    %s28 = scalar_select %p25, %s27, %s18
    %p29 = scmp.ge.s32.totalorder %s28, 2
    %s30 = scalar_select %p29, 0, %s28
    %s32 = sadd.s32 %s31, 1
    %p35 = scmp.eq.s32.totalorder %s11, 1
    %p36 = scmp.ne.s32.totalorder %s31, %s33
    %p37 = scmp.eq.s32.totalorder %s11, 0
    %p38 = por %p36, %p37
    %p39 = scmp.ne.s32.totalorder %s31, %s33
    %p40 = scmp.eq.s32.totalorder %s16, 1
    %p41 = por %p39, %p40
    %p42 = scmp.ne.s32.totalorder %s33, %s34
    %p43 = scmp.eq.s32.totalorder %s16, 0
    %p44 = por %p42, %p43
    %p45 = scmp.ne.s32.totalorder %s33, %s34
    %p46 = scmp.eq.s32.totalorder %s17, 1
    %p47 = por %p45, %p46
    %p49 = scmp.ne.s32.totalorder %s34, %s48
    %p50 = scmp.eq.s32.totalorder %s17, 0
    %p51 = por %p49, %p50
    %s52 = ssub.s32 %s18, %s30
    %s53 = ssub.s32 %s19, %s26
    %s54 = sor.u32 %s52, %s53
    %p55 = scmp.eq.s32.totalorder %s54, 0
    %s57 = sadd.s32 %s56, 1
    %s58 = scalar_select %p55, %s56, %s57
    %p61 = pneg %p55
    %p62 = scmp.eq.s32.totalorder %s11, 1
    %p63 = por %p61, %p62
    %p64 = scmp.ne.s32.totalorder %s56, %s59
    %p65 = scmp.eq.s32.totalorder %s11, 0
    %p66 = por %p64, %p65
    %p67 = scmp.ne.s32.totalorder %s56, %s59
    %p68 = scmp.eq.s32.totalorder %s16, 1
    %p69 = por %p67, %p68
    %p70 = scmp.ne.s32.totalorder %s59, %s60
    %p71 = scmp.eq.s32.totalorder %s16, 0
    %p72 = por %p70, %p71
    %p73 = scmp.ne.s32.totalorder %s59, %s60
    %p74 = scmp.eq.s32.totalorder %s17, 1
    %p75 = por %p73, %p74
    %p77 = scmp.ne.s32.totalorder %s60, %s76
    %p78 = scmp.eq.s32.totalorder %s17, 0
    %p79 = por %p77, %p78
    %s81 = sadd.s32 %s80, 1
    %p84 = scmp.eq.s32.totalorder %s11, 1
    %p85 = scmp.ne.s32.totalorder %s80, %s82
    %p86 = scmp.eq.s32.totalorder %s11, 0
    %p87 = por %p85, %p86
    %p88 = scmp.ne.s32.totalorder %s80, %s82
    %p89 = scmp.eq.s32.totalorder %s16, 1
    %p90 = por %p88, %p89
    %p91 = scmp.ne.s32.totalorder %s82, %s83
    %p92 = scmp.eq.s32.totalorder %s16, 0
    %p93 = por %p91, %p92
    %p94 = scmp.ne.s32.totalorder %s82, %s83
    %p95 = scmp.eq.s32.totalorder %s17, 1
    %p96 = por %p94, %p95
    %p98 = scmp.ne.s32.totalorder %s83, %s97
    %p99 = scmp.eq.s32.totalorder %s17, 0
    %p100 = por %p98, %p99
    %s102 = sadd.s32 %s101, 1
    %p105 = scmp.eq.s32.totalorder %s11, 1
    %p106 = scmp.ne.s32.totalorder %s101, %s103
    %p107 = scmp.eq.s32.totalorder %s11, 0
    %p108 = por %p106, %p107
    %p109 = scmp.ne.s32.totalorder %s101, %s103
    %p110 = scmp.eq.s32.totalorder %s16, 1
    %p111 = por %p109, %p110
    %p112 = scmp.ne.s32.totalorder %s103, %s104
    %p113 = scmp.eq.s32.totalorder %s16, 0
    %p114 = por %p112, %p113
    %p115 = scmp.ne.s32.totalorder %s103, %s104
    %p116 = scmp.eq.s32.totalorder %s17, 1
    %p117 = por %p115, %p116
    %p119 = scmp.ne.s32.totalorder %s104, %s118
    %p120 = scmp.eq.s32.totalorder %s17, 0
    %p121 = por %p119, %p120
    %s122 = ssub.s32 %s18, %s30
    %p123 = scmp.eq.s32.totalorder %s122, 0
    %s125 = sadd.s32 %s124, 1
    %s126 = scalar_select %p123, %s124, %s125
    %p129 = pneg %p123
    %p130 = scmp.eq.s32.totalorder %s11, 1
    %p131 = por %p129, %p130
    %p132 = scmp.ne.s32.totalorder %s124, %s127
    %p133 = scmp.eq.s32.totalorder %s11, 0
    %p134 = por %p132, %p133
    %p135 = scmp.ne.s32.totalorder %s124, %s127
    %p136 = scmp.eq.s32.totalorder %s16, 1
    %p137 = por %p135, %p136
    %p138 = scmp.ne.s32.totalorder %s127, %s128
    %p139 = scmp.eq.s32.totalorder %s16, 0
    %p140 = por %p138, %p139
    %p141 = scmp.ne.s32.totalorder %s127, %s128
    %p142 = scmp.eq.s32.totalorder %s17, 1
    %p143 = por %p141, %p142
    %p145 = scmp.ne.s32.totalorder %s128, %s144
    %p146 = scmp.eq.s32.totalorder %s17, 0
    %p147 = por %p145, %p146
    %p148 = scmp.le.s32.totalorder 1, %s11
    %p149 = scmp.lt.s32.totalorder %s11, 3
    %p150 = pnand %p148, %p149
    %p151 = pneg %p150
    // Predicated region
    $region9: #{_lambda_.2} parent=5 // pred_check
      _
    $region10: #{_lambda_.2} parent=5 // pred_check_branch
      %153 = sbr.rel (%p150) target = $region12
    $region11: #{_lambda_.2} parent=5 // pred_region
      %s154 = ssub.s32 %s11, 1
      // Predicated region
      $region13: #{_lambda_.2} parent=11 // pred_check
        %p155 = pneg %p44
      $region14: #{_lambda_.2} parent=11 // pred_check_branch
        %157 = sbr.rel (%p155) target = $region16
      $region15: #{_lambda_.2} parent=11 // pred_region
        _
      $region16: #{_lambda_.2} parent=11 // pred_fallthru
        _
      // Predicated region
      $region17: #{_lambda_.2} parent=11 // pred_check
        %p158 = pneg %p93
      $region18: #{_lambda_.2} parent=11 // pred_check_branch
        %160 = sbr.rel (%p158) target = $region20
      $region19: #{_lambda_.2} parent=11 // pred_region
        _
      $region20: #{_lambda_.2} parent=11 // pred_fallthru
        _
      // Predicated region
      $region21: #{_lambda_.2} parent=11 // pred_check
        %p161 = pneg %p114
      $region22: #{_lambda_.2} parent=11 // pred_check_branch
        %163 = sbr.rel (%p161) target = $region24
      $region23: #{_lambda_.2} parent=11 // pred_region
        _
      $region24: #{_lambda_.2} parent=11 // pred_fallthru
        _
    $region12: #{_lambda_.2} parent=5 // pred_fallthru
      _
    %p164 = scmp.lt.s32.totalorder %s11, 2
    // Predicated region
    $region25: #{_lambda_.2} parent=5 // pred_check
      %p165 = pneg %p164
    $region26: #{_lambda_.2} parent=5 // pred_check_branch
      %167 = sbr.rel (%p165) target = $region28
    $region27: #{_lambda_.2} parent=5 // pred_region
      // Predicated region
      $region29: #{_lambda_.2} parent=27 // pred_check
        %p168 = pneg %p66
      $region30: #{_lambda_.2} parent=27 // pred_check_branch
        %170 = sbr.rel (%p168) target = $region32
      $region31: #{_lambda_.2} parent=27 // pred_region
        %s171 = smul.u32 16, %s19
        %p172 = scmp.lt.s32.totalorder %s18, 1
        %s173 = scalar_select %p172, %s18, 1
        %p174 = scmp.lt.s32.totalorder %s171, 15
        %s175 = scalar_select %p174, %s171, 15
        %s176 = smul.addr %s173, 16
        %s177 = sadd.s32 %s175, %s176
        %s178 = smul.addr %s177, 4
        %s179 = scalar_lea.vmem %s1, %s178
        %s180 = smul.u32 16, %s19
      $region32: #{_lambda_.2} parent=27 // pred_fallthru
        _
    $region28: #{_lambda_.2} parent=5 // pred_fallthru
      _
    %p181 = scmp.le.s32.totalorder 1, %s11
    %p182 = scmp.lt.s32.totalorder %s11, 3
    %p183 = pnand %p181, %p182
    %p184 = pneg %p183
    // Predicated region
    $region33: #{_lambda_.2} parent=5 // pred_check
      _
    $region34: #{_lambda_.2} parent=5 // pred_check_branch
      %186 = sbr.rel (%p183) target = $region36
    $region35: #{_lambda_.2} parent=5 // pred_region
      %s187 = ssub.s32 %s11, 1
      %p188 = pneg %p44
      %p189 = pneg %p41
      %s190 = smul.u32 16, %s21
      %p191 = scmp.lt.s32.totalorder %s20, 1
      %s192 = scalar_select %p191, %s20, 1
      %p193 = scmp.lt.s32.totalorder %s190, 15
      %s194 = scalar_select %p193, %s190, 15
      %s195 = smul.addr %s192, 16
      %s196 = sadd.s32 %s194, %s195
      %s197 = smul.addr %s196, 4
      %s198 = scalar_lea.vmem %s1, %s197
      %p199 = pneg %p72
      %p200 = pneg %p69
      %p201 = pneg %p93
      %p202 = pneg %p90
      %p203 = pneg %p114
      %p204 = pneg %p111
      %p205 = pneg %p140
      %p206 = pneg %p137
      %p207 = scmp.lt.s32.totalorder %s20, 1
      %s208 = scalar_select %p207, %s20, 1
      %s209 = scalar_lea.vmem %s4, %s208
      %s210 = smul.u32 16, %s21
      %p211 = scmp.lt.s32.totalorder %s20, 1
      %s212 = scalar_select %p211, %s20, 1
      %p213 = scmp.lt.s32.totalorder %s210, 15
      %s214 = scalar_select %p213, %s210, 15
      %s215 = smul.addr %s212, 16
      %s216 = sadd.s32 %s214, %s215
      %s217 = smul.addr %s216, 4
      %s218 = scalar_lea.vmem %s1, %s217
      %s219 = smul.u32 16, %s21
      %p220 = scmp.lt.s32.totalorder %s20, 1
      %s221 = scalar_select %p220, %s20, 1
      %s222 = scalar_lea.vmem %s4, %s221
      %p224 = scmp.eq.s32.totalorder %s21, 0
      // Predicated region
      $region37: #{_lambda_.2} parent=35 // pred_check
        %p225 = pneg %p224
      $region38: #{_lambda_.2} parent=35 // pred_check_branch
        %227 = sbr.rel (%p225) target = $region40
      $region39: #{_lambda_.2} parent=35 // pred_region
        %228 = vst [vmem:[#allocation2] sm:$0x1] 0.0
      $region40: #{_lambda_.2} parent=35 // pred_fallthru
        _
      %v229 = vld [vmem:[%s218] sm:$0xf]
      %v230 = vld [vmem:[%s218 + $0x4] sm:$0xf]
      %v231 = vld [vmem:[%s218 + $0x8] sm:$0xf]
      %v232 = vld [vmem:[%s218 + $0xc] sm:$0xf]
      %v233 = vld [vmem:[%s218 + $0x10] sm:$0xf]
      %v234 = vld [vmem:[%s218 + $0x14] sm:$0xf]
      %v235 = vld [vmem:[%s218 + $0x18] sm:$0xf]
      %v236 = vld [vmem:[%s218 + $0x1c] sm:$0xf]
      %v237 = vld [vmem:[%s218 + $0x20] sm:$0xf]
      %v238 = vld [vmem:[%s218 + $0x24] sm:$0xf]
      %v239 = vld [vmem:[%s218 + $0x28] sm:$0xf]
      %v240 = vld [vmem:[%s218 + $0x2c] sm:$0xf]
      %v241 = vld [vmem:[%s218 + $0x30] sm:$0xf]
      %v242 = vld [vmem:[%s218 + $0x34] sm:$0xf]
      %v243 = vld [vmem:[%s218 + $0x38] sm:$0xf]
      %v244 = vld [vmem:[%s218 + $0x3c] sm:$0xf]
      %v245 = vld [vmem:[%s2] sm:$0xf]
      %v246 = vld [vmem:[%s2 + $0x4] sm:$0xf]
      %v247 = vld [vmem:[%s2 + $0x8] sm:$0xf]
      %v248 = vld [vmem:[%s2 + $0xc] sm:$0xf]
      %v249 = vld [vmem:[%s2 + $0x10] sm:$0xf]
      %v250 = vld [vmem:[%s2 + $0x14] sm:$0xf]
      %v251 = vld [vmem:[%s2 + $0x18] sm:$0xf]
      %v252 = vld [vmem:[%s2 + $0x1c] sm:$0xf]
      %v253 = vld [vmem:[%s2 + $0x20] sm:$0xf]
      %v254 = vld [vmem:[%s2 + $0x24] sm:$0xf]
      %v255 = vld [vmem:[%s2 + $0x28] sm:$0xf]
      %v256 = vld [vmem:[%s2 + $0x2c] sm:$0xf]
      %v257 = vld [vmem:[%s2 + $0x30] sm:$0xf]
      %v258 = vld [vmem:[%s2 + $0x34] sm:$0xf]
      %v259 = vld [vmem:[%s2 + $0x38] sm:$0xf]
      %v260 = vld [vmem:[%s2 + $0x3c] sm:$0xf]
      %v261 = vld [vmem:[%s3] sm:$0x1]
      %v263 = vlaneseq
      %v264 = vshrl.u32 %v263, 7
      %v265 = vsub.s32 0, %v264
      %v266 = vrot.slane %v261, %v265
      %v284 = vunpack.c.l.b16 %v229
      %v285 = vunpack.c.l.b16 %v230
      %v286 = vunpack.c.l.b16 %v231
      %v287 = vunpack.c.l.b16 %v232
      %v288 = vunpack.c.l.b16 %v233
      %v289 = vunpack.c.l.b16 %v234
      %v290 = vunpack.c.l.b16 %v235
      %v291 = vunpack.c.l.b16 %v236
      %v292 = vunpack.c.l.b16 %v237
      %v293 = vunpack.c.l.b16 %v238
      %v294 = vunpack.c.l.b16 %v239
      %v295 = vunpack.c.l.b16 %v240
      %v296 = vunpack.c.l.b16 %v241
      %v297 = vunpack.c.l.b16 %v242
      %v298 = vunpack.c.l.b16 %v243
      %v299 = vunpack.c.l.b16 %v244
      %v300 = vpack.c.b16 %v285, %v284
      %v301 = vpack.c.b16 %v287, %v286
      %v302 = vpack.c.b16 %v289, %v288
      %v303 = vpack.c.b16 %v291, %v290
      %v304 = vpack.c.b16 %v293, %v292
      %v305 = vpack.c.b16 %v295, %v294
      %v306 = vpack.c.b16 %v297, %v296
      %v307 = vpack.c.b16 %v299, %v298
      %v332 = vunpack.c.l.b16 %v245
      %v333 = vunpack.c.l.b16 %v246
      %v334 = vunpack.c.l.b16 %v247
      %v335 = vunpack.c.l.b16 %v248
      %v336 = vunpack.c.l.b16 %v249
      %v337 = vunpack.c.l.b16 %v250
      %v338 = vunpack.c.l.b16 %v251
      %v339 = vunpack.c.l.b16 %v252
      %v340 = vunpack.c.l.b16 %v253
      %v341 = vunpack.c.l.b16 %v254
      %v342 = vunpack.c.l.b16 %v255
      %v343 = vunpack.c.l.b16 %v256
      %v344 = vunpack.c.l.b16 %v257
      %v345 = vunpack.c.l.b16 %v258
      %v346 = vunpack.c.l.b16 %v259
      %v347 = vunpack.c.l.b16 %v260
      %v348 = vpack.c.b16 %v333, %v332
      %v349 = vpack.c.b16 %v335, %v334
      %v350 = vpack.c.b16 %v337, %v336
      %v351 = vpack.c.b16 %v339, %v338
      %v352 = vpack.c.b16 %v341, %v340
      %v353 = vpack.c.b16 %v343, %v342
      %v354 = vpack.c.b16 %v345, %v344
      %v355 = vpack.c.b16 %v347, %v346
      %364 = vmatprep.subr.bf16.mxu0 0
      %365 = vmatpush1.bf16.msra.mxu0 %v348
      %366 = vmatprep.subr.bf16.mxu0 0
      %367 = vmatpush1.bf16.msra.mxu0 %v349
      %368 = vmatprep.subr.bf16.mxu0 0
      %369 = vmatpush1.bf16.msra.mxu0 %v350
      %370 = vmatprep.subr.bf16.mxu0 0
      %371 = vmatpush1.bf16.msra.mxu0 %v351
      %372 = vmatprep.subr.bf16.mxu0 0
      %373 = vmatpush1.bf16.msra.mxu0 %v352
      %374 = vmatprep.subr.bf16.mxu0 0
      %375 = vmatpush1.bf16.msra.mxu0 %v353
      %376 = vmatprep.subr.bf16.mxu0 0
      %377 = vmatpush1.bf16.msra.mxu0 %v354
      %378 = vmatprep.subr.bf16.mxu0 0
      %379 = vmatpush1.bf16.msra.mxu0 %v355
      %380 = vmatprep.subr.bf16.mxu0 0
      %381 = vmatpush1.bf16.msra.mxu0 0
      %382 = vmatprep.subr.bf16.mxu0 0
      %383 = vmatpush1.bf16.msra.mxu0 0
      %384 = vmatprep.subr.bf16.mxu0 0
      %385 = vmatpush1.bf16.msra.mxu0 0
      %386 = vmatprep.subr.bf16.mxu0 0
      %387 = vmatpush1.bf16.msra.mxu0 0
      %388 = vmatprep.subr.bf16.mxu0 0
      %389 = vmatpush1.bf16.msra.mxu0 0
      %390 = vmatprep.subr.bf16.mxu0 0
      %391 = vmatpush1.bf16.msra.mxu0 0
      %392 = vmatprep.subr.bf16.mxu0 0
      %393 = vmatpush1.bf16.msra.mxu0 0
      %394 = vmatprep.subr.bf16.mxu0 0
      %395 = vmatpush1.bf16.msra.mxu0 0
      %396 = vmatprep.mubr.bf16.mxu0 0
      %397 = vmatmul.mubr.bf16.gmra.mrb[0].mxu0 %v300
      %v398 = vpop.f32.mrb[0].mxu0
      %v399 = vadd.f32 %v266, %v398
      %v400 = vpop.f32.mrb[0].mxu0
      %v401 = vpop.f32.mrb[0].mxu0
      %v402 = vadd.f32 %v266, %v401
      %v403 = vpop.f32.mrb[0].mxu0
      %404 = vmatprep.mubr.bf16.mxu0 0
      %405 = vmatmul.mubr.bf16.gmra.mrb[0].mxu0 %v301
      %v406 = vpop.f32.mrb[0].mxu0
      %v407 = vadd.f32 %v266, %v406
      %v408 = vpop.f32.mrb[0].mxu0
      %v409 = vpop.f32.mrb[0].mxu0
      %v410 = vadd.f32 %v266, %v409
      %v411 = vpop.f32.mrb[0].mxu0
      %412 = vmatprep.mubr.bf16.mxu0 0
      %413 = vmatmul.mubr.bf16.gmra.mrb[0].mxu0 %v302
      %v414 = vpop.f32.mrb[0].mxu0
      %v415 = vadd.f32 %v266, %v414
      %v416 = vpop.f32.mrb[0].mxu0
      %v417 = vpop.f32.mrb[0].mxu0
      %v418 = vadd.f32 %v266, %v417
      %v419 = vpop.f32.mrb[0].mxu0
      %420 = vmatprep.mubr.bf16.mxu0 0
      %421 = vmatmul.mubr.bf16.gmra.mrb[0].mxu0 %v303
      %v422 = vpop.f32.mrb[0].mxu0
      %v423 = vadd.f32 %v266, %v422
      %v424 = vpop.f32.mrb[0].mxu0
      %v425 = vpop.f32.mrb[0].mxu0
      %v426 = vadd.f32 %v266, %v425
      %v427 = vpop.f32.mrb[0].mxu0
      %428 = vmatprep.mubr.bf16.mxu0 0
      %429 = vmatmul.mubr.bf16.gmra.mrb[0].mxu0 %v304
      %v430 = vpop.f32.mrb[0].mxu0
      %v431 = vadd.f32 %v266, %v430
      %v432 = vpop.f32.mrb[0].mxu0
      %v433 = vpop.f32.mrb[0].mxu0
      %v434 = vadd.f32 %v266, %v433
      %v435 = vpop.f32.mrb[0].mxu0
      %436 = vmatprep.mubr.bf16.mxu0 0
      %437 = vmatmul.mubr.bf16.gmra.mrb[0].mxu0 %v305
      %v438 = vpop.f32.mrb[0].mxu0
      %v439 = vadd.f32 %v266, %v438
      %v440 = vpop.f32.mrb[0].mxu0
      %v441 = vpop.f32.mrb[0].mxu0
      %v442 = vadd.f32 %v266, %v441
      %v443 = vpop.f32.mrb[0].mxu0
      %444 = vmatprep.mubr.bf16.mxu0 0
      %445 = vmatmul.mubr.bf16.gmra.mrb[0].mxu0 %v306
      %v446 = vpop.f32.mrb[0].mxu0
      %v447 = vadd.f32 %v266, %v446
      %v448 = vpop.f32.mrb[0].mxu0
      %v449 = vpop.f32.mrb[0].mxu0
      %v450 = vadd.f32 %v266, %v449
      %v451 = vpop.f32.mrb[0].mxu0
      %452 = vmatprep.mubr.bf16.mxu0 0
      %453 = vmatmul.mubr.bf16.gmra.mrb[0].mxu0 %v307
      %v454 = vpop.f32.mrb[0].mxu0
      %v455 = vadd.f32 %v266, %v454
      %v456 = vpop.f32.mrb[0].mxu0
      %v457 = vpop.f32.mrb[0].mxu0
      %v458 = vadd.f32 %v266, %v457
      %v459 = vpop.f32.mrb[0].mxu0
      %460 = vdwg.mxu0
      %v461 = vsub.f32 0.0, %v399
      %v462 = vsub.f32 0.0, %v402
      %v463 = vsub.f32 0.0, %v407
      %v464 = vsub.f32 0.0, %v410
      %v465 = vsub.f32 0.0, %v415
      %v466 = vsub.f32 0.0, %v418
      %v467 = vsub.f32 0.0, %v423
      %v468 = vsub.f32 0.0, %v426
      %v469 = vsub.f32 0.0, %v431
      %v470 = vsub.f32 0.0, %v434
      %v471 = vsub.f32 0.0, %v439
      %v472 = vsub.f32 0.0, %v442
      %v473 = vsub.f32 0.0, %v447
      %v474 = vsub.f32 0.0, %v450
      %v475 = vsub.f32 0.0, %v455
      %v476 = vsub.f32 0.0, %v458
      %v477 = vmul.f32 %v461, 1.442695
      %v478 = vpow.pop %v477
      %v479 = vmul.f32 %v462, 1.442695
      %v480 = vpow.pop %v479
      %v481 = vmul.f32 %v463, 1.442695
      %v482 = vpow.pop %v481
      %v483 = vmul.f32 %v464, 1.442695
      %v484 = vpow.pop %v483
      %v485 = vmul.f32 %v465, 1.442695
      %v486 = vpow.pop %v485
      %v487 = vmul.f32 %v466, 1.442695
      %v488 = vpow.pop %v487
      %v489 = vmul.f32 %v467, 1.442695
      %v490 = vpow.pop %v489
      %v491 = vmul.f32 %v468, 1.442695
      %v492 = vpow.pop %v491
      %v493 = vmul.f32 %v469, 1.442695
      %v494 = vpow.pop %v493
      %v495 = vmul.f32 %v470, 1.442695
      %v496 = vpow.pop %v495
      %v497 = vmul.f32 %v471, 1.442695
      %v498 = vpow.pop %v497
      %v499 = vmul.f32 %v472, 1.442695
      %v500 = vpow.pop %v499
      %v501 = vmul.f32 %v473, 1.442695
      %v502 = vpow.pop %v501
      %v503 = vmul.f32 %v474, 1.442695
      %v504 = vpow.pop %v503
      %v505 = vmul.f32 %v475, 1.442695
      %v506 = vpow.pop %v505
      %v507 = vmul.f32 %v476, 1.442695
      %v508 = vpow.pop %v507
      %v509 = vadd.f32 %v478, 1.0
      %v510 = vadd.f32 %v480, 1.0
      %v511 = vadd.f32 %v482, 1.0
      %v512 = vadd.f32 %v484, 1.0
      %v513 = vadd.f32 %v486, 1.0
      %v514 = vadd.f32 %v488, 1.0
      %v515 = vadd.f32 %v490, 1.0
      %v516 = vadd.f32 %v492, 1.0
      %v517 = vadd.f32 %v494, 1.0
      %v518 = vadd.f32 %v496, 1.0
      %v519 = vadd.f32 %v498, 1.0
      %v520 = vadd.f32 %v500, 1.0
      %v521 = vadd.f32 %v502, 1.0
      %v522 = vadd.f32 %v504, 1.0
      %v523 = vadd.f32 %v506, 1.0
      %v524 = vadd.f32 %v508, 1.0
      %v525 = vrcp.pop %v509
      %v526 = vmul.f32 1.0, %v525
      %v527 = vrcp.pop %v510
      %v528 = vmul.f32 1.0, %v527
      %v529 = vrcp.pop %v511
      %v530 = vmul.f32 1.0, %v529
      %v531 = vrcp.pop %v512
      %v532 = vmul.f32 1.0, %v531
      %v533 = vrcp.pop %v513
      %v534 = vmul.f32 1.0, %v533
      %v535 = vrcp.pop %v514
      %v536 = vmul.f32 1.0, %v535
      %v537 = vrcp.pop %v515
      %v538 = vmul.f32 1.0, %v537
      %v539 = vrcp.pop %v516
      %v540 = vmul.f32 1.0, %v539
      %v541 = vrcp.pop %v517
      %v542 = vmul.f32 1.0, %v541
      %v543 = vrcp.pop %v518
      %v544 = vmul.f32 1.0, %v543
      %v545 = vrcp.pop %v519
      %v546 = vmul.f32 1.0, %v545
      %v547 = vrcp.pop %v520
      %v548 = vmul.f32 1.0, %v547
      %v549 = vrcp.pop %v521
      %v550 = vmul.f32 1.0, %v549
      %v551 = vrcp.pop %v522
      %v552 = vmul.f32 1.0, %v551
      %v553 = vrcp.pop %v523
      %v554 = vmul.f32 1.0, %v553
      %v555 = vrcp.pop %v524
      %v556 = vmul.f32 1.0, %v555
      %v557 = vmul.f32 %v399, %v526
      %v558 = vmul.f32 %v402, %v528
      %v559 = vmul.f32 %v407, %v530
      %v560 = vmul.f32 %v410, %v532
      %v561 = vmul.f32 %v415, %v534
      %v562 = vmul.f32 %v418, %v536
      %v563 = vmul.f32 %v423, %v538
      %v564 = vmul.f32 %v426, %v540
      %v565 = vmul.f32 %v431, %v542
      %v566 = vmul.f32 %v434, %v544
      %v567 = vmul.f32 %v439, %v546
      %v568 = vmul.f32 %v442, %v548
      %v569 = vmul.f32 %v447, %v550
      %v570 = vmul.f32 %v450, %v552
      %v571 = vmul.f32 %v455, %v554
      %v572 = vmul.f32 %v458, %v556
      %s573 = sld [smem:[#allocation3]]
      %v574 = vmax.f32 %v557, 1e-06
      %v575 = vmax.f32 %v558, 1e-06
      %v576 = vmax.f32 %v559, 1e-06
      %v577 = vmax.f32 %v560, 1e-06
      %v578 = vmax.f32 %v561, 1e-06
      %v579 = vmax.f32 %v562, 1e-06
      %v580 = vmax.f32 %v563, 1e-06
      %v581 = vmax.f32 %v564, 1e-06
      %v582 = vmax.f32 %v565, 1e-06
      %v583 = vmax.f32 %v566, 1e-06
      %v584 = vmax.f32 %v567, 1e-06
      %v585 = vmax.f32 %v568, 1e-06
      %v586 = vmax.f32 %v569, 1e-06
      %v587 = vmax.f32 %v570, 1e-06
      %v588 = vmax.f32 %v571, 1e-06
      %v589 = vmax.f32 %v572, 1e-06
      %v590 = vlog2.pop %v574
      %v591 = vmul.f32 %v590, 0.6931472
      %v592 = vlog2.pop %v575
      %v593 = vmul.f32 %v592, 0.6931472
      %v594 = vlog2.pop %v576
      %v595 = vmul.f32 %v594, 0.6931472
      %v596 = vlog2.pop %v577
      %v597 = vmul.f32 %v596, 0.6931472
      %v598 = vlog2.pop %v578
      %v599 = vmul.f32 %v598, 0.6931472
      %v600 = vlog2.pop %v579
      %v601 = vmul.f32 %v600, 0.6931472
      %v602 = vlog2.pop %v580
      %v603 = vmul.f32 %v602, 0.6931472
      %v604 = vlog2.pop %v581
      %v605 = vmul.f32 %v604, 0.6931472
      %v606 = vlog2.pop %v582
      %v607 = vmul.f32 %v606, 0.6931472
      %v608 = vlog2.pop %v583
      %v609 = vmul.f32 %v608, 0.6931472
      %v610 = vlog2.pop %v584
      %v611 = vmul.f32 %v610, 0.6931472
      %v612 = vlog2.pop %v585
      %v613 = vmul.f32 %v612, 0.6931472
      %v614 = vlog2.pop %v586
      %v615 = vmul.f32 %v614, 0.6931472
      %v616 = vlog2.pop %v587
      %v617 = vmul.f32 %v616, 0.6931472
      %v618 = vlog2.pop %v588
      %v619 = vmul.f32 %v618, 0.6931472
      %v620 = vlog2.pop %v589
      %v621 = vmul.f32 %v620, 0.6931472
      %v622 = vstv %s573
      %v623 = vmul.f32 %v622, %v591
      %v624 = vmul.f32 %v622, %v593
      %v625 = vmul.f32 %v622, %v595
      %v626 = vmul.f32 %v622, %v597
      %v627 = vmul.f32 %v622, %v599
      %v628 = vmul.f32 %v622, %v601
      %v629 = vmul.f32 %v622, %v603
      %v630 = vmul.f32 %v622, %v605
      %v631 = vmul.f32 %v622, %v607
      %v632 = vmul.f32 %v622, %v609
      %v633 = vmul.f32 %v622, %v611
      %v634 = vmul.f32 %v622, %v613
      %v635 = vmul.f32 %v622, %v615
      %v636 = vmul.f32 %v622, %v617
      %v637 = vmul.f32 %v622, %v619
      %v638 = vmul.f32 %v622, %v621
      %v639 = vmul.f32 %v623, 1.442695
      %v640 = vpow.pop %v639
      %v641 = vmul.f32 %v624, 1.442695
      %v642 = vpow.pop %v641
      %v643 = vmul.f32 %v625, 1.442695
      %v644 = vpow.pop %v643
      %v645 = vmul.f32 %v626, 1.442695
      %v646 = vpow.pop %v645
      %v647 = vmul.f32 %v627, 1.442695
      %v648 = vpow.pop %v647
      %v649 = vmul.f32 %v628, 1.442695
      %v650 = vpow.pop %v649
      %v651 = vmul.f32 %v629, 1.442695
      %v652 = vpow.pop %v651
      %v653 = vmul.f32 %v630, 1.442695
      %v654 = vpow.pop %v653
      %v655 = vmul.f32 %v631, 1.442695
      %v656 = vpow.pop %v655
      %v657 = vmul.f32 %v632, 1.442695
      %v658 = vpow.pop %v657
      %v659 = vmul.f32 %v633, 1.442695
      %v660 = vpow.pop %v659
      %v661 = vmul.f32 %v634, 1.442695
      %v662 = vpow.pop %v661
      %v663 = vmul.f32 %v635, 1.442695
      %v664 = vpow.pop %v663
      %v665 = vmul.f32 %v636, 1.442695
      %v666 = vpow.pop %v665
      %v667 = vmul.f32 %v637, 1.442695
      %v668 = vpow.pop %v667
      %v669 = vmul.f32 %v638, 1.442695
      %v670 = vpow.pop %v669
      %v671 = vld [vmem:[#allocation2] sm:$0x1]
      %v672 = vadd.f32 %v640, %v642
      %v673 = vadd.f32 %v672, %v644
      %v674 = vadd.f32 %v673, %v646
      %v675 = vadd.f32 %v674, %v648
      %v676 = vadd.f32 %v675, %v650
      %v677 = vadd.f32 %v676, %v652
      %v678 = vadd.f32 %v677, %v654
      %v679 = vadd.f32 %v678, %v656
      %v680 = vadd.f32 %v679, %v658
      %v681 = vadd.f32 %v680, %v660
      %v682 = vadd.f32 %v681, %v662
      %v683 = vadd.f32 %v682, %v664
      %v684 = vadd.f32 %v683, %v666
      %v685 = vadd.f32 %v684, %v668
      %v686 = vadd.f32 %v685, %v670
      %v687 = vrot.slane %v686, 4
      %v688 = vadd.f32 %v686, %v687
      %v689 = vrot.slane %v688, 2
      %v690 = vadd.f32 %v688, %v689
      %v691 = vrot.slane %v690, 1
      %v692 = vadd.f32 %v690, %v691
      %v693 = vadd.f32 %v671, %v692
      %694 = vst [vmem:[#allocation2] sm:$0x1] %v693
      // Predicated region
      $region41: #{_lambda_.2} parent=35 // pred_check
        %p695 = pneg %p224
      $region42: #{_lambda_.2} parent=35 // pred_check_branch
        %697 = sbr.rel (%p695) target = $region44
      $region43: #{_lambda_.2} parent=35 // pred_region
        %v698 = vld [vmem:[#allocation2] sm:$0x1]
        %v699 = vmul.f32 %v698, 0.0078125
        %v700 = vlog2.pop %v699
        %v701 = vmul.f32 %v700, 0.6931472
        %v702 = vrcp.pop %v622
        %v703 = vmul.f32 %v701, %v702
        %v704 = vmul.f32 %v703, 1.442695
        %v705 = vpow.pop %v704
        %706 = vst [vmem:[%s222] sm:$0x1] %v705
      $region44: #{_lambda_.2} parent=35 // pred_fallthru
        _
      %p707 = scmp.lt.s32.totalorder %s20, 1
      %s708 = scalar_select %p707, %s20, 1
      %s709 = scalar_lea.vmem %s4, %s708
      // Predicated region
      $region45: #{_lambda_.2} parent=35 // pred_check
        %p710 = pneg %p137
      $region46: #{_lambda_.2} parent=35 // pred_check_branch
        %712 = sbr.rel (%p710) target = $region48
      $region47: #{_lambda_.2} parent=35 // pred_region
        _
      $region48: #{_lambda_.2} parent=35 // pred_fallthru
        _
    $region36: #{_lambda_.2} parent=5 // pred_fallthru
      _
    %p713 = scmp.le.s32.totalorder 2, %s11
    // Predicated region
    $region49: #{_lambda_.2} parent=5 // pred_check
      %p714 = pneg %p713
    $region50: #{_lambda_.2} parent=5 // pred_check_branch
      %716 = sbr.rel (%p714) target = $region52
    $region51: #{_lambda_.2} parent=5 // pred_region
      %s717 = ssub.s32 %s11, 2
      // Predicated region
      $region53: #{_lambda_.2} parent=51 // pred_check
        %p718 = pneg %p143
      $region54: #{_lambda_.2} parent=51 // pred_check_branch
        %720 = sbr.rel (%p718) target = $region56
      $region55: #{_lambda_.2} parent=51 // pred_region
        %p721 = scmp.lt.s32.totalorder %s22, 1
        %s722 = scalar_select %p721, %s22, 1
        %s723 = scalar_lea.vmem %s4, %s722
      $region56: #{_lambda_.2} parent=51 // pred_fallthru
        _
    $region52: #{_lambda_.2} parent=5 // pred_fallthru
      _
  $region6: #{_lambda_.2} parent=0 // loop_footer
    %s15 = sadd.s32 1, %s11
  $region7: #{_lambda_.2} parent=0 // loop_footer_branch
    %10 = sbr.rel target = $region3
  $region8: #{_lambda_.2} parent=0 // loop_exit
    _

</llo_original>
